<compile_context>
chip_gen: v5e
topology: v5e:2x2
jax: 0.10.0
libtpu: 0.0.40
codegen_flags: <defaults>
</compile_context>

<pallas_src>
import functools

import jax
import jax.numpy as jnp
from jax.experimental import pallas as pl
from jax.experimental.pallas import tpu as pltpu

LANES = 128
SUBLANES = 8
MAX_BLOCK_ROWS = 4096   # 4096 * 128 * 4B = 2 MiB per f32 input block


def _minmax_kernel(x_ref, min_ref, max_ref, *, block_rows, tail_rows, bps, splits):
    """Streaming min/max over lane-dense 2-D slabs.

    x_ref   : (block_rows, 128) VMEM tile of the flattened input
    min_ref : (8, 128) f32 running-min accumulator (output block, resident
              across the "arbitrary" grid axis)
    max_ref : (8, 128) f32 running-max accumulator
    """
    i = pl.program_id(1)   # block index within this split (reduction axis)

    @pl.when(i == 0)
    def _init():
        min_ref[...] = jnp.full(min_ref.shape, jnp.inf, min_ref.dtype)
        max_ref[...] = jnp.full(max_ref.shape, -jnp.inf, max_ref.dtype)

    x = x_ref[...].astype(jnp.float32)
    # TODO(synk): for bf16 inputs on v6e/v7x, accumulate in bf16 and cast only
    # at the final reduce to halve vreg count / VALU ops (v5e has no bf16 VALU).

    def _accumulate(x_for_min, x_for_max):
        if block_rows % SUBLANES == 0:
            # In-register fold: (block_rows, 128) -> (block_rows//8, 8, 128),
            # reduce the leading (vreg-aligned) axis.  Pure VALU, no cross-lane
            # work, one accumulator read+write per block.
            fold = lambda a: a.reshape(block_rows // SUBLANES, SUBLANES, LANES)
            blk_min = jnp.min(fold(x_for_min), axis=0)
            blk_max = jnp.max(fold(x_for_max), axis=0)
        else:
            # Tiny single-block input whose row count is not a multiple of 8.
            blk_min = jnp.broadcast_to(
                jnp.min(x_for_min, axis=0, keepdims=True), (SUBLANES, LANES))
            blk_max = jnp.broadcast_to(
                jnp.max(x_for_max, axis=0, keepdims=True), (SUBLANES, LANES))
        min_ref[...] = jnp.minimum(min_ref[...], blk_min)
        max_ref[...] = jnp.maximum(max_ref[...], blk_max)

    if tail_rows == block_rows:
        # No partial block anywhere: fully mask-free kernel.
        _accumulate(x, x)
    else:
        # Only the globally-last block is partial; every other block takes the
        # mask-free fast path (pl.when executes exactly one branch at runtime).
        c = pl.program_id(0)
        is_tail = jnp.logical_and(c == splits - 1, i == bps - 1)

        @pl.when(jnp.logical_not(is_tail))
        def _interior():
            _accumulate(x, x)

        @pl.when(is_tail)
        def _tail():
            row = jax.lax.broadcasted_iota(jnp.int32, x.shape, 0)
            valid = row < tail_rows
            _accumulate(jnp.where(valid, x, jnp.inf),
                        jnp.where(valid, x, -jnp.inf))


@functools.partial(jax.jit, static_argnames=("max_block_rows",))
def _compute_stats(x, *, max_block_rows=MAX_BLOCK_ROWS):
    """Returns (3,) f32 [min, max, all_finite] with the reduction done in Pallas."""
    assert max_block_rows % SUBLANES == 0
    total = int(x.size)
    assert total > 0, "PrintLayer stats undefined for empty input"

    rows = -(-total // LANES)                      # ceil-div
    flat = x.reshape(-1)
    lane_pad = rows * LANES - total
    if lane_pad:
        # The 2-D reshape needs a multiple of 128 elements.  Pad with a *real*
        # element of x so no in-kernel lane mask is needed.
        # TODO(synk): this materializes a copy of x; only hit when
        # x.size % 128 != 0 (never for typical NN activation shapes).
        flat = jnp.concatenate([flat, jnp.broadcast_to(flat[:1], (lane_pad,))])
    x2d = flat.reshape(rows, LANES)

    if rows <= max_block_rows:
        block_rows = rows       # full-extent block: no (8,128) divisibility needed
        nblocks = 1
    else:
        block_rows = max_block_rows
        nblocks = -(-rows // block_rows)

    # 2-way split of the block range -> both TensorCores on v7x (runs as a
    # plain sequential loop, still correct, on single-TC v5e/v6e).
    # TODO(synk): generalize the split to odd block counts (falls back to 1).
    splits = 2 if (nblocks >= 2 and nblocks % 2 == 0) else 1
    bps = nblocks // splits                         # blocks per split
    tail_rows = rows - (nblocks - 1) * block_rows   # valid rows in last block

    kernel = functools.partial(_minmax_kernel, block_rows=block_rows,
                               tail_rows=tail_rows, bps=bps, splits=splits)

    part_min, part_max = pl.pallas_call(
        kernel,
        out_shape=(
            jax.ShapeDtypeStruct((splits * SUBLANES, LANES), jnp.float32),
            jax.ShapeDtypeStruct((splits * SUBLANES, LANES), jnp.float32),
        ),
        grid_spec=pltpu.PrefetchScalarGridSpec(
            num_scalar_prefetch=0,
            grid=(splits, bps),
            in_specs=[pl.BlockSpec((block_rows, LANES),
                                   lambda c, i: (c * bps + i, 0))],
            out_specs=[pl.BlockSpec((SUBLANES, LANES), lambda c, i: (c, 0)),
                       pl.BlockSpec((SUBLANES, LANES), lambda c, i: (c, 0))],
        ),
        compiler_params=pltpu.CompilerParams(
            dimension_semantics=("parallel", "arbitrary")),
    )(x2d)

    # Tiny finalize in plain JAX (a few KiB): combine per-split partial vregs.
    x_min = jnp.min(part_min)
    x_max = jnp.max(part_max)
    # inf / -inf show up in max / min directly.  NaN propagates through
    # jnp.minimum/maximum and jnp.min/max (documented numpy semantics), making
    # min/max NaN and hence non-finite.
    # TODO(synk): if a future lowering ever uses non-NaN-propagating min/max,
    # reinstate an explicit (x - x)-sum accumulator for NaN detection.
    all_finite = jnp.logical_and(jnp.isfinite(x_min), jnp.isfinite(x_max))
    return jnp.stack([x_min, x_max, all_finite.astype(jnp.float32)])


def print_layer_forward(x):
    """Pallas equivalent of PrintLayer.forward: prints stats, returns x."""
    stats = jax.device_get(_compute_stats(x))   # single host sync for all 3 values
    x_min = float(stats[0])
    x_max = float(stats[1])
    all_finite = bool(stats[2] > 0.5)
    # TODO(synk): in a training loop, batch/async these prints -- the per-call
    # device->host sync dominates latency at CIFAR-10 feature-map sizes.
    print('isfinite(x).all(): {}, min. {:.5f}, max. {:.5f}'.format(
        all_finite, x_min, x_max))
    return x   # identity: no kernel write-back needed


if __name__ == "__main__":
    key = jax.random.PRNGKey(0)
    # Small NCHW input consistent with a CIFAR-10-style conv feature map.
    x = jax.random.normal(key, (2, 4, 16, 16), dtype=jnp.float32)

    y = print_layer_forward(x)
    y = jax.block_until_ready(y)

    # Identity check.
    assert y.shape == x.shape and y.dtype == x.dtype
    assert bool(jnp.all(y == x))

    # Stats check against plain JAX.
    stats = jax.device_get(_compute_stats(x))
    assert abs(float(stats[0]) - float(jnp.min(x))) < 1e-6
    assert abs(float(stats[1]) - float(jnp.max(x))) < 1e-6
    assert float(stats[2]) > 0.5   # all finite

    # Non-128-multiple size + inf: exercises the real-element lane pad and the
    # non-finite detection (inf path is independent of NaN-propagation details).
    x2 = jnp.concatenate(
        [jnp.arange(300, dtype=jnp.float32) - 100.0,
         jnp.array([jnp.inf], dtype=jnp.float32)])
    s2 = jax.device_get(_compute_stats(x2))
    assert abs(float(s2[0]) - (-100.0)) < 1e-6
    assert float(s2[2]) < 0.5      # inf detected -> not all finite

    # Multi-block path with a ragged row tail (partial last block, masked
    # in-kernel only on that block).
    x3 = (jnp.arange(40000, dtype=jnp.float32) % 997.0) - 500.0
    s3 = jax.device_get(_compute_stats(x3, max_block_rows=64))
    assert abs(float(s3[0]) - float(jnp.min(x3))) < 1e-6
    assert abs(float(s3[1]) - float(jnp.max(x3))) < 1e-6
    assert float(s3[2]) > 0.5

    # Even block count -> 2-way "parallel" split (both TensorCores on v7x).
    x4 = jax.random.normal(jax.random.PRNGKey(1), (384, 128), dtype=jnp.float32)
    s4 = jax.device_get(_compute_stats(x4, max_block_rows=64))
    assert abs(float(s4[0]) - float(jnp.min(x4))) < 1e-6
    assert abs(float(s4[1]) - float(jnp.max(x4))) < 1e-6
    assert float(s4[2]) > 0.5

    print("KERNEL_OK")
</pallas_src>

<mosaic_0001>
module attributes {stable_mosaic.version = 11 : i64} {
  func.func @_minmax_kernel(%arg0: i32, %arg1: i32, %arg2: memref<16x128xf32, #tpu.memory_space<vmem>>, %arg3: memref<8x128xf32, #tpu.memory_space<vmem>>, %arg4: memref<8x128xf32, #tpu.memory_space<vmem>>) attributes {dimension_semantics = [#tpu.dimension_semantics<parallel>, #tpu.dimension_semantics<arbitrary>], iteration_bounds = array<i64: 1, 1>, scalar_prefetch = 0 : i64, scratch_operands = 0 : i64, tpu.core_type = #tpu.core_type<tc>, window_params = [{transform_indices = @transform_0, window_bounds = array<i64: 16, 128>}, {transform_indices = @transform_1, window_bounds = array<i64: 8, 128>}, {transform_indices = @transform_2, window_bounds = array<i64: 8, 128>}]} {
    %c0_i32 = arith.constant 0 : i32
    %0 = arith.cmpi eq, %arg1, %c0_i32 : i32
    %1 = arith.extui %0 : i1 to i32
    %c0_i32_0 = arith.constant 0 : i32
    %2 = arith.cmpi ne, %1, %c0_i32_0 : i32
    scf.if %2 {
      %cst_11 = arith.constant 0x7F800000 : f32
      %14 = vector.broadcast %cst_11 : f32 to vector<8x128xf32>
      %c0_12 = arith.constant 0 : index
      %c0_13 = arith.constant 0 : index
      %15 = vector.load %arg3[%c0_12, %c0_13] : memref<8x128xf32, #tpu.memory_space<vmem>>, vector<8x128xf32>
      tpu.vector_store %arg3[%c0_12, %c0_13], %14 {strides = array<i32>} : memref<8x128xf32, #tpu.memory_space<vmem>>, vector<8x128xf32>,
      %cst_14 = arith.constant 0xFF800000 : f32
      %16 = vector.broadcast %cst_14 : f32 to vector<8x128xf32>
      %c0_15 = arith.constant 0 : index
      %c0_16 = arith.constant 0 : index
      %17 = vector.load %arg4[%c0_15, %c0_16] : memref<8x128xf32, #tpu.memory_space<vmem>>, vector<8x128xf32>
      tpu.vector_store %arg4[%c0_15, %c0_16], %16 {strides = array<i32>} : memref<8x128xf32, #tpu.memory_space<vmem>>, vector<8x128xf32>,
    } else {
    }
    %c0 = arith.constant 0 : index
    %c0_1 = arith.constant 0 : index
    %3 = vector.load %arg2[%c0, %c0_1] : memref<16x128xf32, #tpu.memory_space<vmem>>, vector<16x128xf32>
    %4 = vector.shape_cast %3 : vector<16x128xf32> to vector<2x8x128xf32>
    %cst = arith.constant dense<0x7F800000> : vector<8x128xf32>
    %5 = vector.multi_reduction <minimumf>, %4, %cst [0] : vector<2x8x128xf32> to vector<8x128xf32>
    %6 = vector.shape_cast %3 : vector<16x128xf32> to vector<2x8x128xf32>
    %cst_2 = arith.constant dense<0xFF800000> : vector<8x128xf32>
    %7 = vector.multi_reduction <maximumf>, %6, %cst_2 [0] : vector<2x8x128xf32> to vector<8x128xf32>
    %c0_3 = arith.constant 0 : index
    %c0_4 = arith.constant 0 : index
    %8 = vector.load %arg3[%c0_3, %c0_4] : memref<8x128xf32, #tpu.memory_space<vmem>>, vector<8x128xf32>
    %9 = arith.minimumf %8, %5 : vector<8x128xf32>
    %c0_5 = arith.constant 0 : index
    %c0_6 = arith.constant 0 : index
    %10 = vector.load %arg3[%c0_5, %c0_6] : memref<8x128xf32, #tpu.memory_space<vmem>>, vector<8x128xf32>
    tpu.vector_store %arg3[%c0_5, %c0_6], %9 {strides = array<i32>} : memref<8x128xf32, #tpu.memory_space<vmem>>, vector<8x128xf32>,
    %c0_7 = arith.constant 0 : index
    %c0_8 = arith.constant 0 : index
    %11 = vector.load %arg4[%c0_7, %c0_8] : memref<8x128xf32, #tpu.memory_space<vmem>>, vector<8x128xf32>
    %12 = arith.maximumf %11, %7 : vector<8x128xf32>
    %c0_9 = arith.constant 0 : index
    %c0_10 = arith.constant 0 : index
    %13 = vector.load %arg4[%c0_9, %c0_10] : memref<8x128xf32, #tpu.memory_space<vmem>>, vector<8x128xf32>
    tpu.vector_store %arg4[%c0_9, %c0_10], %12 {strides = array<i32>} : memref<8x128xf32, #tpu.memory_space<vmem>>, vector<8x128xf32>,
    return
  }
  func.func @transform_0(%arg0: i32, %arg1: i32) -> (i32, i32) {
    %c1_i32 = arith.constant 1 : i32
    %0 = arith.muli %arg0, %c1_i32 : i32
    %1 = arith.addi %0, %arg1 : i32
    %c0_i32 = arith.constant 0 : i32
    %c0_i32_0 = arith.constant 0 : i32
    return %1, %c0_i32 : i32, i32
  }
  func.func @transform_1(%arg0: i32, %arg1: i32) -> (i32, i32) {
    %c0_i32 = arith.constant 0 : i32
    %c0_i32_0 = arith.constant 0 : i32
    return %arg0, %c0_i32 : i32, i32
  }
  func.func @transform_2(%arg0: i32, %arg1: i32) -> (i32, i32) {
    %c0_i32 = arith.constant 0 : i32
    %c0_i32_0 = arith.constant 0 : i32
    return %arg0, %c0_i32 : i32, i32
  }
}

</mosaic_0001>

<llo_original>
// kernel: _compute_stats.1
$region0: #{_compute_stats.1}
  #allocation0 [shape = 'u32[]', space=smem, size = 0x4, offset = 0x4, fixed_abs, tag = 'smem constant byte address 0x4 - core index']
  #allocation1 [shape = 'u32[72,128]{1,0:T(1,128)}', space=vmem, size = 0x9000, scoped, tag = 'internal scratch']
  %s0 = inlined_call_operand.vmem [shape: f32[16,128], index: 0, kind: input, shape index: {}]
  %s1 = inlined_call_operand.vmem [shape: f32[8,128], index: 1, kind: output, shape index: {0}]
  %s2 = inlined_call_operand.vmem [shape: f32[8,128], index: 2, kind: output, shape index: {1}]
  %3 = xla_tuple %s1, %s2
  %s4 = sld [smem:[#allocation0]]
  $region26: #{_compute_stats.1} parent=0
    _
  %s6 = ssub.s32 1, %s4
  %s7 = scalar_select 0, %s6, %s4
  // Predicated region
  $region2: #{_compute_stats.1} parent=0 // pred_check
    _
  $region3: #{_compute_stats.1} parent=0 // pred_check_branch
    %9 = sbr.rel (0) target = $region5
  $region4: #{_compute_stats.1} parent=0 // pred_region
    %s10 = sadd.s32 0, 0
    %s11 = smul.u32 2, %s10
    %p12 = scmp.lt.s32.totalorder %s11, 1
    %s13 = scalar_select %p12, %s11, 1
    %s14 = smul.addr %s13, 8
    %s15 = scalar_lea.vmem %s0, %s14
    %s16 = sadd.s32 0, 0
    %s17 = smul.u32 2, %s16
  $region5: #{_compute_stats.1} parent=0 // pred_fallthru
    _
  %s18 = sadd.s32 0, 0
  %s19 = smul.u32 2, %s18
  %p20 = scmp.lt.s32.totalorder %s19, 1
  %s21 = scalar_select %p20, %s19, 1
  %s22 = smul.addr %s21, 8
  %s23 = scalar_lea.vmem %s0, %s22
  %s24 = sadd.s32 0, 0
  %s25 = smul.u32 2, %s24
  %p26 = scmp.lt.s32.totalorder %s25, 1
  %s27 = scalar_select %p26, %s25, 1
  %s28 = smul.addr %s27, 8
  %s29 = scalar_lea.vmem %s0, %s28
  %s30 = sadd.s32 0, 0
  %s31 = smul.u32 2, %s30
  %p32 = scmp.eq.s32.totalorder 0, 0
  // Predicated region
  $region6: #{_compute_stats.1} parent=0 // pred_check
    %p33 = pneg %p32
  $region7: #{_compute_stats.1} parent=0 // pred_check_branch
    %35 = sbr.rel (%p33) target = $region9
  $region8: #{_compute_stats.1} parent=0 // pred_region
    %36 = vst [vmem:[%s1] sm:$0xff] inf
    %37 = vst [vmem:[%s2] sm:$0xff] -inf
  $region9: #{_compute_stats.1} parent=0 // pred_fallthru
    _
  %v38 = vld [vmem:[%s29] sm:$0xff]
  %v39 = vld [vmem:[%s29 + $0x8] sm:$0xff]
  %v40 = vmin.f32 %v38, %v39
  %v41 = vmax.f32 %v38, %v39
  %v42 = vld [vmem:[%s1] sm:$0xff]
  %v43 = vmin.f32 %v42, %v40
  %44 = vst [vmem:[%s1] sm:$0xff] %v43
  %v45 = vld [vmem:[%s2] sm:$0xff]
  %v46 = vmax.f32 %v45, %v41
  %47 = vst [vmem:[%s2] sm:$0xff] %v46
  // Predicated region
  $region10: #{_compute_stats.1} parent=0 // pred_check
    _
  $region11: #{_compute_stats.1} parent=0 // pred_check_branch
    %49 = sbr.rel (0) target = $region13
  $region12: #{_compute_stats.1} parent=0 // pred_region
    _
  $region13: #{_compute_stats.1} parent=0 // pred_fallthru
    _
  // Predicated region
  $region14: #{_compute_stats.1} parent=0 // pred_check
    _
  $region15: #{_compute_stats.1} parent=0 // pred_check_branch
    %51 = sbr.rel (0) target = $region17
  $region16: #{_compute_stats.1} parent=0 // pred_region
    _
  $region17: #{_compute_stats.1} parent=0 // pred_fallthru
    _
  // Predicated region
  $region18: #{_compute_stats.1} parent=0 // pred_check
    _
  $region19: #{_compute_stats.1} parent=0 // pred_check_branch
    %53 = sbr.rel (0) target = $region21
  $region20: #{_compute_stats.1} parent=0 // pred_region
    _
  $region21: #{_compute_stats.1} parent=0 // pred_fallthru
    _
  // Predicated region
  $region22: #{_compute_stats.1} parent=0 // pred_check
    _
  $region23: #{_compute_stats.1} parent=0 // pred_check_branch
    %55 = sbr.rel (0) target = $region25
  $region24: #{_compute_stats.1} parent=0 // pred_region
    _
  $region25: #{_compute_stats.1} parent=0 // pred_fallthru
    _

</llo_original>
